<compile_context>
chip_gen: v7x
topology: tpu7x:2x2x1
jax: 0.10.0
libtpu: 0.0.40
codegen_flags: <defaults>
</compile_context>

<pallas_src>
import functools

import jax
import jax.numpy as jnp
from jax.experimental import pallas as pl
from jax.experimental.pallas import tpu as pltpu


# ----------------------------- kernel body ---------------------------------

def _mlp_kernel(x_ref, w1_ref, b1_ref, w2_ref, b2_ref, o_ref, *,
                compute_dtype, precision):
    # in_drop: identity in eval mode.
    x = x_ref[...]
    w1 = w1_ref[...]
    w2 = w2_ref[...]
    if compute_dtype is not None:
        x = x.astype(compute_dtype)
        w1 = w1.astype(compute_dtype)
        w2 = w2.astype(compute_dtype)

    # Linear(input, hidden) + Tanh  (MXU matmul, f32 accumulation; tanh on EUP)
    h = jnp.tanh(
        jnp.dot(x, w1, precision=precision,
                preferred_element_type=jnp.float32) + b1_ref[...])

    # net_drop: identity in eval mode.
    if compute_dtype is not None:
        h = h.astype(compute_dtype)

    # Linear(hidden, output) + Tanh
    y = jnp.tanh(
        jnp.dot(h, w2, precision=precision,
                preferred_element_type=jnp.float32) + b2_ref[...])

    o_ref[...] = y.astype(o_ref.dtype)


# ----------------------------- helpers --------------------------------------

def _round_up(n, m):
    return ((n + m - 1) // m) * m


def _cdiv(a, b):
    return -(-a // b)


def _vmem_capacity_bytes():
    """Physical per-core VMEM bytes, with a conservative fallback (v7x size)."""
    cap = None
    try:
        cap = getattr(pltpu.get_tpu_info(), "vmem_capacity_bytes", None)
    except Exception:
        cap = None
    return int(cap) if cap else 64 * 1024 * 1024


def prepare_params(w1, b1, w2, b2, param_dtype=None):
    """One-time parameter prep, outside the per-call forward path.

    No feature-dim padding is required anymore (contraction dims keep their
    true size; output blocks use the true width), so this only reshapes the
    biases to 2-D once and optionally casts params (e.g. bf16 to halve the
    resident-weight HBM/VMEM footprint).
    """
    b1 = jnp.reshape(b1, (1, -1))
    b2 = jnp.reshape(b2, (1, -1))
    if param_dtype is not None:
        w1, b1, w2, b2 = (a.astype(param_dtype) for a in (w1, b1, w2, b2))
    return w1, b1, w2, b2


# ----------------------------- forward wrapper -------------------------------

def input_adapter_mlp(x, w1, b1, w2, b2, *,
                      compute_dtype=None,
                      precision=jax.lax.Precision.HIGHEST,
                      block_batch=1024,
                      x_buffers=2,
                      out_dtype=None):
    """Fused 2-layer MLP forward: Linear -> tanh -> Linear -> tanh."""
    orig_shape = x.shape
    in_size = orig_shape[-1]
    hidden = w1.shape[1]
    out_size = w2.shape[1]
    if b1.ndim == 1:
        b1 = b1.reshape(1, hidden)
    if b2.ndim == 1:
        b2 = b2.reshape(1, out_size)
    out_dtype = x.dtype if out_dtype is None else out_dtype

    # nn.Linear applies to the last dim; fold any leading dims into batch.
    x2 = x.reshape(-1, in_size)
    batch = x2.shape[0]

    x_item = jnp.dtype(x.dtype).itemsize
    p_item = jnp.dtype(w1.dtype).itemsize
    o_item = jnp.dtype(out_dtype).itemsize

    # ---- VMEM budget & batch-tile selection ---------------------------------
    cap = _vmem_capacity_bytes()
    budget = min(cap * 3 // 4, 48 * 1024 * 1024)

    # Pallas allocates 2 buffers per input spec, even for the VMEM-resident
    # weight/bias blocks with constant index_maps -> count them twice.
    weight_bytes = 2 * ((in_size * hidden + hidden)
                        + (hidden * out_size + out_size)) * p_item
    avail = budget - weight_bytes
    if avail <= 0:
        # TODO(synk): tile the contraction dims (emit_pipeline over K blocks)
        # when the weights alone exceed the VMEM budget.
        raise ValueError(
            f"InputAdapterMLP weights ({weight_bytes} B double-buffered) exceed "
            f"the VMEM budget ({budget} B)")

    # Per batch-row bytes: pipelined x / out tiles + f32 intermediates (h, y).
    per_row = (x_buffers * in_size * x_item
               + 2 * out_size * o_item
               + (hidden + out_size) * 4)
    tb = max(8, min(int(block_batch), avail // per_row))
    tb = (tb // 8) * 8
    # v7x megacore: guarantee >= 2 grid steps so both TensorCores get work.
    if batch >= 16:
        tb = min(tb, _round_up(_cdiv(batch, 2), 8))
    if batch <= tb:
        tb = batch  # single exact tile (block dim == full array dim is legal)
    num_tiles = _cdiv(batch, tb)

    vmem_needed = (weight_bytes
                   + x_buffers * tb * in_size * x_item
                   + 2 * tb * out_size * o_item
                   + tb * (hidden + out_size) * 4)
    vmem_limit = int(min(cap * 3 // 4,
                         max(vmem_needed + vmem_needed // 4, 32 * 1024 * 1024)))

    # HIGHEST only matters for f32 operands; bf16 compute path uses DEFAULT.
    if compute_dtype is not None and jnp.dtype(compute_dtype) != jnp.dtype(jnp.float32):
        dot_precision = None
    else:
        dot_precision = precision

    kernel = functools.partial(_mlp_kernel,
                               compute_dtype=compute_dtype,
                               precision=dot_precision)

    x_spec_kwargs = {}
    if x_buffers != 2:
        # Deepen the x pipeline only when requested (exposed-DMA mitigation).
        x_spec_kwargs["pipeline_mode"] = pl.Buffered(x_buffers)

    cost = pl.CostEstimate(
        flops=2 * batch * (in_size * hidden + hidden * out_size),
        transcendentals=batch * (hidden + out_size),
        bytes_accessed=(batch * in_size * x_item
                        + (w1.size + b1.size + w2.size + b2.size) * p_item
                        + batch * out_size * o_item),
    )

    out2 = pl.pallas_call(
        kernel,
        out_shape=jax.ShapeDtypeStruct((batch, out_size), out_dtype),
        grid=(num_tiles,),
        in_specs=[
            # x: tiled over batch, double-buffered by the pipeline; K unpadded.
            pl.BlockSpec((tb, in_size), lambda i: (i, 0), **x_spec_kwargs),
            # weights / biases: constant index_map -> VMEM-resident, unpadded.
            pl.BlockSpec((in_size, hidden), lambda i: (0, 0)),
            pl.BlockSpec((1, hidden), lambda i: (0, 0)),
            pl.BlockSpec((hidden, out_size), lambda i: (0, 0)),
            pl.BlockSpec((1, out_size), lambda i: (0, 0)),
        ],
        out_specs=pl.BlockSpec((tb, out_size), lambda i: (i, 0)),
        compiler_params=pltpu.CompilerParams(
            dimension_semantics=("parallel",),
            vmem_limit_bytes=vmem_limit,
        ),
        cost_estimate=cost,
    )(x2, w1, b1, w2, b2)

    return out2.reshape(orig_shape[:-1] + (out_size,))


# ----------------------------- reference ------------------------------------

def reference_forward(x, w1, b1, w2, b2, precision=None):
    h = jnp.tanh(jnp.dot(x, w1, precision=precision) + b1)
    return jnp.tanh(jnp.dot(h, w2, precision=precision) + b2)


if __name__ == "__main__":
    # Small shapes consistent with the module's __init__ / forward.
    batch = 8
    input_size = 64
    hidden_size = 32
    output_size = 16

    key = jax.random.PRNGKey(0)
    kx, kw1, kb1, kw2, kb2 = jax.random.split(key, 5)

    x = jax.random.normal(kx, (batch, input_size), dtype=jnp.float32)
    # Deterministic parameter init (uniform, roughly PyTorch Linear scale).
    lim1 = 1.0 / (input_size ** 0.5)
    lim2 = 1.0 / (hidden_size ** 0.5)
    w1 = jax.random.uniform(kw1, (input_size, hidden_size), jnp.float32, -lim1, lim1)
    b1 = jax.random.uniform(kb1, (hidden_size,), jnp.float32, -lim1, lim1)
    w2 = jax.random.uniform(kw2, (hidden_size, output_size), jnp.float32, -lim2, lim2)
    b2 = jax.random.uniform(kb2, (output_size,), jnp.float32, -lim2, lim2)

    # One-time parameter prep (outside the per-call path).
    pw1, pb1, pw2, pb2 = prepare_params(w1, b1, w2, b2)

    # Strict-accuracy f32 path (HIGHEST matmul precision).
    out = input_adapter_mlp(x, pw1, pb1, pw2, pb2)
    jax.block_until_ready(out)

    ref = reference_forward(x, w1, b1, w2, b2,
                            precision=jax.lax.Precision.HIGHEST)
    assert out.shape == (batch, output_size)
    assert jnp.allclose(out, ref, atol=1e-5, rtol=1e-5)

    # bf16 throughput path (v5e/v6e lever): bf16 MXU inputs, f32 accumulation.
    out_bf16 = input_adapter_mlp(x, pw1, pb1, pw2, pb2,
                                 compute_dtype=jnp.bfloat16)
    jax.block_until_ready(out_bf16)
    assert jnp.allclose(out_bf16.astype(jnp.float32), ref, atol=5e-2, rtol=5e-2)

    print("KERNEL_OK")
</pallas_src>

<mosaic_0001>
module attributes {stable_mosaic.version = 11 : i64} {
  func.func @_mlp_kernel(%arg0: i32, %arg1: memref<8x64xf32, #tpu.memory_space<vmem>>, %arg2: memref<64x32xf32, #tpu.memory_space<vmem>>, %arg3: memref<1x32xf32, #tpu.memory_space<vmem>>, %arg4: memref<32x16xf32, #tpu.memory_space<vmem>>, %arg5: memref<1x16xf32, #tpu.memory_space<vmem>>, %arg6: memref<8x16xf32, #tpu.memory_space<vmem>>) attributes {dimension_semantics = [#tpu.dimension_semantics<parallel>], iteration_bounds = array<i64: 1>, scalar_prefetch = 0 : i64, scratch_operands = 0 : i64, tpu.core_type = #tpu.core_type<tc>, window_params = [{transform_indices = @transform_0, window_bounds = array<i64: 8, 64>}, {pipeline_mode = #tpu.pipeline_mode<synchronous>, transform_indices = @transform_1, window_bounds = array<i64: 64, 32>}, {pipeline_mode = #tpu.pipeline_mode<synchronous>, transform_indices = @transform_2, window_bounds = array<i64: 1, 32>}, {pipeline_mode = #tpu.pipeline_mode<synchronous>, transform_indices = @transform_3, window_bounds = array<i64: 32, 16>}, {pipeline_mode = #tpu.pipeline_mode<synchronous>, transform_indices = @transform_4, window_bounds = array<i64: 1, 16>}, {transform_indices = @transform_5, window_bounds = array<i64: 8, 16>}]} {
    %c0 = arith.constant 0 : index
    %c0_0 = arith.constant 0 : index
    %0 = vector.load %arg1[%c0, %c0_0] : memref<8x64xf32, #tpu.memory_space<vmem>>, vector<8x64xf32>
    %c0_1 = arith.constant 0 : index
    %c0_2 = arith.constant 0 : index
    %1 = vector.load %arg2[%c0_1, %c0_2] : memref<64x32xf32, #tpu.memory_space<vmem>>, vector<64x32xf32>
    %c0_3 = arith.constant 0 : index
    %c0_4 = arith.constant 0 : index
    %2 = vector.load %arg4[%c0_3, %c0_4] : memref<32x16xf32, #tpu.memory_space<vmem>>, vector<32x16xf32>
    %cst = arith.constant dense<0.000000e+00> : vector<8x32xf32>
    %3 = tpu.matmul %0, %1, %cst {dimension_numbers = #tpu.dot_dimension_numbers<[1], [0], [0], [1], [0, 0, 1, 1], [], []>, precision = #tpu.contract_precision<fp32>} : vector<8x64xf32>, vector<64x32xf32>, vector<8x32xf32> -> vector<8x32xf32>
    %c0_5 = arith.constant 0 : index
    %c0_6 = arith.constant 0 : index
    %4 = vector.load %arg3[%c0_5, %c0_6] : memref<1x32xf32, #tpu.memory_space<vmem>>, vector<1x32xf32>
    %5 = vector.broadcast %4 : vector<1x32xf32> to vector<8x32xf32>
    %6 = arith.addf %3, %5 : vector<8x32xf32>
    %7 = math.tanh %6 : vector<8x32xf32>
    %cst_7 = arith.constant dense<0.000000e+00> : vector<8x16xf32>
    %8 = tpu.matmul %7, %2, %cst_7 {dimension_numbers = #tpu.dot_dimension_numbers<[1], [0], [0], [1], [0, 0, 1, 1], [], []>, precision = #tpu.contract_precision<fp32>} : vector<8x32xf32>, vector<32x16xf32>, vector<8x16xf32> -> vector<8x16xf32>
    %c0_8 = arith.constant 0 : index
    %c0_9 = arith.constant 0 : index
    %9 = vector.load %arg5[%c0_8, %c0_9] : memref<1x16xf32, #tpu.memory_space<vmem>>, vector<1x16xf32>
    %10 = vector.broadcast %9 : vector<1x16xf32> to vector<8x16xf32>
    %11 = arith.addf %8, %10 : vector<8x16xf32>
    %12 = math.tanh %11 : vector<8x16xf32>
    %c0_10 = arith.constant 0 : index
    %c0_11 = arith.constant 0 : index
    %13 = vector.load %arg6[%c0_10, %c0_11] : memref<8x16xf32, #tpu.memory_space<vmem>>, vector<8x16xf32>
    tpu.vector_store %arg6[%c0_10, %c0_11], %12 {strides = array<i32>} : memref<8x16xf32, #tpu.memory_space<vmem>>, vector<8x16xf32>,
    return
  }
  func.func @transform_0(%arg0: i32) -> (i32, i32) {
    %c0_i32 = arith.constant 0 : i32
    %c0_i32_0 = arith.constant 0 : i32
    return %arg0, %c0_i32 : i32, i32
  }
  func.func @transform_1(%arg0: i32) -> (i32, i32) {
    %c0_i32 = arith.constant 0 : i32
    %c0_i32_0 = arith.constant 0 : i32
    %c0_i32_1 = arith.constant 0 : i32
    return %c0_i32, %c0_i32_0 : i32, i32
  }
  func.func @transform_2(%arg0: i32) -> (i32, i32) {
    %c0_i32 = arith.constant 0 : i32
    %c0_i32_0 = arith.constant 0 : i32
    %c0_i32_1 = arith.constant 0 : i32
    return %c0_i32, %c0_i32_0 : i32, i32
  }
  func.func @transform_3(%arg0: i32) -> (i32, i32) {
    %c0_i32 = arith.constant 0 : i32
    %c0_i32_0 = arith.constant 0 : i32
    %c0_i32_1 = arith.constant 0 : i32
    return %c0_i32, %c0_i32_0 : i32, i32
  }
  func.func @transform_4(%arg0: i32) -> (i32, i32) {
    %c0_i32 = arith.constant 0 : i32
    %c0_i32_0 = arith.constant 0 : i32
    %c0_i32_1 = arith.constant 0 : i32
    return %c0_i32, %c0_i32_0 : i32, i32
  }
  func.func @transform_5(%arg0: i32) -> (i32, i32) {
    %c0_i32 = arith.constant 0 : i32
    %c0_i32_0 = arith.constant 0 : i32
    return %arg0, %c0_i32 : i32, i32
  }
}

</mosaic_0001>

<llo_original>
// kernel: tpu_custom_call.1
$region0: #{tpu_custom_call.1}
  #allocation0 [shape = 'u32[]', space=smem, size = 0x4, offset = 0x4, fixed_abs, tag = 'smem constant byte address 0x4 - core index']
  #allocation1 [shape = 'u32[144,128]{1,0:T(1,128)}', space=vmem, size = 0x12000, scoped, tag = 'internal scratch']
  %s0 = inlined_call_operand.vmem [shape: f32[8,64], index: 0, kind: input, shape index: {}]
  %s1 = inlined_call_operand.vmem [shape: f32[64,32], index: 1, kind: input, shape index: {}]
  %s2 = inlined_call_operand.vmem [shape: f32[1,32], index: 2, kind: input, shape index: {}]
  %s3 = inlined_call_operand.vmem [shape: f32[32,16], index: 3, kind: input, shape index: {}]
  %s4 = inlined_call_operand.vmem [shape: f32[1,16], index: 4, kind: input, shape index: {}]
  %s5 = inlined_call_operand.hbm [shape: f32[8,16], index: 5, kind: output, shape index: {}]
  %s6 = sld [smem:[#allocation0]]
  $region30: #{tpu_custom_call.1} parent=0
    _
  %s8 = ssub.s32 1, %s6
  %s9 = scalar_select 0, %s8, %s6
  $region1: #{tpu_custom_call.1} parent=0
    #allocation2 [shape = 'u8[4096]{0}', space=vmem, size = 0x1000, scoped, tag = 'output window, operand 0, single buffered']
    #allocation3 [shape = 's32[1]{0}', space=sflag, size = 0x4, scoped, tag = 'scoped memory for tpu_custom_call.1']
    %10 = vsyncpa [#allocation3], 0
    // Predicated region
    $region2: #{tpu_custom_call.1} parent=1 // pred_check
      _
    $region3: #{tpu_custom_call.1} parent=1 // pred_check_branch
      %12 = sbr.rel (0) target = $region5
    $region4: #{tpu_custom_call.1} parent=1 // pred_region
      _
    $region5: #{tpu_custom_call.1} parent=1 // pred_fallthru
      _
    // Predicated region
    $region6: #{tpu_custom_call.1} parent=1 // pred_check
      _
    $region7: #{tpu_custom_call.1} parent=1 // pred_check_branch
      %14 = sbr.rel (0) target = $region9
    $region8: #{tpu_custom_call.1} parent=1 // pred_region
      _
    $region9: #{tpu_custom_call.1} parent=1 // pred_fallthru
      _
    // Predicated region
    $region10: #{tpu_custom_call.1} parent=1 // pred_check
      _
    $region11: #{tpu_custom_call.1} parent=1 // pred_check_branch
      %16 = sbr.rel (0) target = $region13
    $region12: #{tpu_custom_call.1} parent=1 // pred_region
      _
    $region13: #{tpu_custom_call.1} parent=1 // pred_fallthru
      _
    // Predicated region
    $region14: #{tpu_custom_call.1} parent=1 // pred_check
      _
    $region15: #{tpu_custom_call.1} parent=1 // pred_check_branch
      %18 = sbr.rel (0) target = $region17
    $region16: #{tpu_custom_call.1} parent=1 // pred_region
      _
    $region17: #{tpu_custom_call.1} parent=1 // pred_fallthru
      _
    // Predicated region
    $region18: #{tpu_custom_call.1} parent=1 // pred_check
      _
    $region19: #{tpu_custom_call.1} parent=1 // pred_check_branch
      %20 = sbr.rel (0) target = $region21
    $region20: #{tpu_custom_call.1} parent=1 // pred_region
      _
    $region21: #{tpu_custom_call.1} parent=1 // pred_fallthru
      _
    %v21 = vld [vmem:[%s0] sm:$0xff]
    %v22 = vld [vmem:[%s1] sm:$0xff]
    %v23 = vld [vmem:[%s1 + $0x8] sm:$0xff]
    %v24 = vld [vmem:[%s1 + $0x10] sm:$0xff]
    %v25 = vld [vmem:[%s1 + $0x18] sm:$0xff]
    %v26 = vld [vmem:[%s1 + $0x20] sm:$0xff]
    %v27 = vld [vmem:[%s1 + $0x28] sm:$0xff]
    %v28 = vld [vmem:[%s1 + $0x30] sm:$0xff]
    %v29 = vld [vmem:[%s1 + $0x38] sm:$0xff]
    %v30 = vld [vmem:[%s3] sm:$0xff]
    %v31 = vld [vmem:[%s3 + $0x8] sm:$0xff]
    %v32 = vld [vmem:[%s3 + $0x10] sm:$0xff]
    %v33 = vld [vmem:[%s3 + $0x18] sm:$0xff]
    %v34 = vld [vmem:[%s2] sm:$0x1]
    %v36 = vlaneseq
    %v37 = vshrl.u32 %v36, 7
    %v38 = vsub.s32 0, %v37
    %v39 = vrot.slane %v34, %v38
    %vm41 = vcmask 523264
    %v43 = vsel %vm41, %v21, 0
    %45 = vmatprep.subr.mxu0 0.0
    %v46 = vand.u32 %v22, 4294901760
    %47 = vmatpush1.msra.mxu0 %v46
    %48 = vmatprep.subr.mxu0 0.0
    %v49 = vand.u32 %v23, 4294901760
    %50 = vmatpush1.msra.mxu0 %v49
    %51 = vmatprep.subr.mxu0 0.0
    %v52 = vand.u32 %v24, 4294901760
    %53 = vmatpush1.msra.mxu0 %v52
    %54 = vmatprep.subr.mxu0 0.0
    %v55 = vand.u32 %v25, 4294901760
    %56 = vmatpush1.msra.mxu0 %v55
    %57 = vmatprep.subr.mxu0 0.0
    %v58 = vand.u32 %v26, 4294901760
    %59 = vmatpush1.msra.mxu0 %v58
    %60 = vmatprep.subr.mxu0 0.0
    %v61 = vand.u32 %v27, 4294901760
    %62 = vmatpush1.msra.mxu0 %v61
    %63 = vmatprep.subr.mxu0 0.0
    %v64 = vand.u32 %v28, 4294901760
    %65 = vmatpush1.msra.mxu0 %v64
    %66 = vmatprep.subr.mxu0 0.0
    %v67 = vand.u32 %v29, 4294901760
    %68 = vmatpush1.msra.mxu0 %v67
    %69 = vmatprep.subr.mxu0 0.0
    %70 = vmatpush1.msra.mxu0 0.0
    %71 = vmatprep.subr.mxu0 0.0
    %72 = vmatpush1.msra.mxu0 0.0
    %73 = vmatprep.subr.mxu0 0.0
    %74 = vmatpush1.msra.mxu0 0.0
    %75 = vmatprep.subr.mxu0 0.0
    %76 = vmatpush1.msra.mxu0 0.0
    %77 = vmatprep.subr.mxu0 0.0
    %78 = vmatpush1.msra.mxu0 0.0
    %79 = vmatprep.subr.mxu0 0.0
    %80 = vmatpush1.msra.mxu0 0.0
    %81 = vmatprep.subr.mxu0 0.0
    %82 = vmatpush1.msra.mxu0 0.0
    %83 = vmatprep.subr.mxu0 0.0
    %84 = vmatpush1.msra.mxu0 0.0
    %85 = vmatprep.subr.mxu0 0.0
    %86 = vmatpush1.msra.mxu0 0.0
    %87 = vmatprep.subr.mxu0 0.0
    %88 = vmatpush1.msra.mxu0 0.0
    %89 = vmatprep.subr.mxu0 0.0
    %90 = vmatpush1.msra.mxu0 0.0
    %91 = vmatprep.subr.mxu0 0.0
    %92 = vmatpush1.msra.mxu0 0.0
    %93 = vmatprep.subr.mxu0 0.0
    %94 = vmatpush1.msra.mxu0 0.0
    %95 = vmatprep.subr.mxu0 0.0
    %96 = vmatpush1.msra.mxu0 0.0
    %97 = vmatprep.subr.mxu0 0.0
    %98 = vmatpush1.msra.mxu0 0.0
    %99 = vmatprep.subr.mxu0 0.0
    %100 = vmatpush1.msra.mxu0 0.0
    %101 = vmatprep.subr.mxu0 0.0
    %102 = vmatpush1.msra.mxu0 0.0
    %103 = vmatprep.subr.mxu0 0.0
    %104 = vmatpush1.msra.mxu0 0.0
    %105 = vmatprep.subr.mxu0 0.0
    %106 = vmatpush1.msra.mxu0 0.0
    %107 = vmatprep.subr.mxu0 0.0
    %108 = vmatpush1.msra.mxu0 0.0
    %109 = vmatprep.subr.mxu0 0.0
    %110 = vmatpush1.msra.mxu0 0.0
    %111 = vmatprep.subr.mxu0 0.0
    %112 = vmatpush1.msra.mxu0 0.0
    %113 = vmatprep.subr.mxu0 0.0
    %114 = vmatpush1.msra.mxu0 0.0
    %115 = vmatprep.subr.mxu0 0.0
    %116 = vmatpush1.msra.mxu0 0.0
    %117 = vmatprep.mubr.f32.mxu0 0.0
    %v118 = vand.u32 %v43, 4294901760
    %v119 = vsub.f32 %v43, %v118
    %v120 = vand.u32 %v119, 4294901760
    %v121 = vsub.f32 %v119, %v120
    %v122 = vand.u32 %v121, 4294901760
    %123 = vmatmul.mubr.f32.gmra.mrb[0].mxu0 %v122
    %v124 = vpop.f32.mrb[0].mxu0
    %v125 = vadd.f32 %v39, %v124
    %v126 = vpop.f32.mrb[0].mxu0
    %127 = vdwg.mxu0
    %128 = vmatprep.subr.mxu0 0.0
    %v129 = vand.u32 %v22, 4294901760
    %v130 = vsub.f32 %v22, %v129
    %v131 = vand.u32 %v130, 4294901760
    %v132 = vsub.f32 %v130, %v131
    %v133 = vand.u32 %v132, 4294901760
    %134 = vmatpush1.msra.mxu0 %v133
    %135 = vmatprep.subr.mxu0 0.0
    %v136 = vand.u32 %v23, 4294901760
    %v137 = vsub.f32 %v23, %v136
    %v138 = vand.u32 %v137, 4294901760
    %v139 = vsub.f32 %v137, %v138
    %v140 = vand.u32 %v139, 4294901760
    %141 = vmatpush1.msra.mxu0 %v140
    %142 = vmatprep.subr.mxu0 0.0
    %v143 = vand.u32 %v24, 4294901760
    %v144 = vsub.f32 %v24, %v143
    %v145 = vand.u32 %v144, 4294901760
    %v146 = vsub.f32 %v144, %v145
    %v147 = vand.u32 %v146, 4294901760
    %148 = vmatpush1.msra.mxu0 %v147
    %149 = vmatprep.subr.mxu0 0.0
    %v150 = vand.u32 %v25, 4294901760
    %v151 = vsub.f32 %v25, %v150
    %v152 = vand.u32 %v151, 4294901760
    %v153 = vsub.f32 %v151, %v152
    %v154 = vand.u32 %v153, 4294901760
    %155 = vmatpush1.msra.mxu0 %v154
    %156 = vmatprep.subr.mxu0 0.0
    %v157 = vand.u32 %v26, 4294901760
    %v158 = vsub.f32 %v26, %v157
    %v159 = vand.u32 %v158, 4294901760
    %v160 = vsub.f32 %v158, %v159
    %v161 = vand.u32 %v160, 4294901760
    %162 = vmatpush1.msra.mxu0 %v161
    %163 = vmatprep.subr.mxu0 0.0
    %v164 = vand.u32 %v27, 4294901760
    %v165 = vsub.f32 %v27, %v164
    %v166 = vand.u32 %v165, 4294901760
    %v167 = vsub.f32 %v165, %v166
    %v168 = vand.u32 %v167, 4294901760
    %169 = vmatpush1.msra.mxu0 %v168
    %170 = vmatprep.subr.mxu0 0.0
    %v171 = vand.u32 %v28, 4294901760
    %v172 = vsub.f32 %v28, %v171
    %v173 = vand.u32 %v172, 4294901760
    %v174 = vsub.f32 %v172, %v173
    %v175 = vand.u32 %v174, 4294901760
    %176 = vmatpush1.msra.mxu0 %v175
    %177 = vmatprep.subr.mxu0 0.0
    %v178 = vand.u32 %v29, 4294901760
    %v179 = vsub.f32 %v29, %v178
    %v180 = vand.u32 %v179, 4294901760
    %v181 = vsub.f32 %v179, %v180
    %v182 = vand.u32 %v181, 4294901760
    %183 = vmatpush1.msra.mxu0 %v182
    %184 = vmatprep.subr.mxu0 0.0
    %185 = vmatpush1.msra.mxu0 0.0
    %186 = vmatprep.subr.mxu0 0.0
    %187 = vmatpush1.msra.mxu0 0.0
    %188 = vmatprep.subr.mxu0 0.0
    %189 = vmatpush1.msra.mxu0 0.0
    %190 = vmatprep.subr.mxu0 0.0
    %191 = vmatpush1.msra.mxu0 0.0
    %192 = vmatprep.subr.mxu0 0.0
    %193 = vmatpush1.msra.mxu0 0.0
    %194 = vmatprep.subr.mxu0 0.0
    %195 = vmatpush1.msra.mxu0 0.0
    %196 = vmatprep.subr.mxu0 0.0
    %197 = vmatpush1.msra.mxu0 0.0
    %198 = vmatprep.subr.mxu0 0.0
    %199 = vmatpush1.msra.mxu0 0.0
    %200 = vmatprep.subr.mxu0 0.0
    %201 = vmatpush1.msra.mxu0 0.0
    %202 = vmatprep.subr.mxu0 0.0
    %203 = vmatpush1.msra.mxu0 0.0
    %204 = vmatprep.subr.mxu0 0.0
    %205 = vmatpush1.msra.mxu0 0.0
    %206 = vmatprep.subr.mxu0 0.0
    %207 = vmatpush1.msra.mxu0 0.0
    %208 = vmatprep.subr.mxu0 0.0
    %209 = vmatpush1.msra.mxu0 0.0
    %210 = vmatprep.subr.mxu0 0.0
    %211 = vmatpush1.msra.mxu0 0.0
    %212 = vmatprep.subr.mxu0 0.0
    %213 = vmatpush1.msra.mxu0 0.0
    %214 = vmatprep.subr.mxu0 0.0
    %215 = vmatpush1.msra.mxu0 0.0
    %216 = vmatprep.subr.mxu0 0.0
    %217 = vmatpush1.msra.mxu0 0.0
    %218 = vmatprep.subr.mxu0 0.0
    %219 = vmatpush1.msra.mxu0 0.0
    %220 = vmatprep.subr.mxu0 0.0
    %221 = vmatpush1.msra.mxu0 0.0
    %222 = vmatprep.subr.mxu0 0.0
    %223 = vmatpush1.msra.mxu0 0.0
    %224 = vmatprep.subr.mxu0 0.0
    %225 = vmatpush1.msra.mxu0 0.0
    %226 = vmatprep.subr.mxu0 0.0
    %227 = vmatpush1.msra.mxu0 0.0
    %228 = vmatprep.subr.mxu0 0.0
    %229 = vmatpush1.msra.mxu0 0.0
    %230 = vmatprep.subr.mxu0 0.0
    %231 = vmatpush1.msra.mxu0 0.0
    %232 = vmatprep.mubr.f32.mxu0 0.0
    %v233 = vand.u32 %v43, 4294901760
    %234 = vmatmul.mubr.f32.gmra.mrb[0].mxu0 %v233
    %v235 = vpop.f32.mrb[0].mxu0
    %v236 = vadd.f32 %v125, %v235
    %v237 = vpop.f32.mrb[0].mxu0
    %238 = vdwg.mxu0
    %239 = vmatprep.subr.mxu0 0.0
    %v240 = vand.u32 %v22, 4294901760
    %v241 = vsub.f32 %v22, %v240
    %242 = vmatpush1.msra.mxu0 %v241
    %243 = vmatprep.subr.mxu0 0.0
    %v244 = vand.u32 %v23, 4294901760
    %v245 = vsub.f32 %v23, %v244
    %246 = vmatpush1.msra.mxu0 %v245
    %247 = vmatprep.subr.mxu0 0.0
    %v248 = vand.u32 %v24, 4294901760
    %v249 = vsub.f32 %v24, %v248
    %250 = vmatpush1.msra.mxu0 %v249
    %251 = vmatprep.subr.mxu0 0.0
    %v252 = vand.u32 %v25, 4294901760
    %v253 = vsub.f32 %v25, %v252
    %254 = vmatpush1.msra.mxu0 %v253
    %255 = vmatprep.subr.mxu0 0.0
    %v256 = vand.u32 %v26, 4294901760
    %v257 = vsub.f32 %v26, %v256
    %258 = vmatpush1.msra.mxu0 %v257
    %259 = vmatprep.subr.mxu0 0.0
    %v260 = vand.u32 %v27, 4294901760
    %v261 = vsub.f32 %v27, %v260
    %262 = vmatpush1.msra.mxu0 %v261
    %263 = vmatprep.subr.mxu0 0.0
    %v264 = vand.u32 %v28, 4294901760
    %v265 = vsub.f32 %v28, %v264
    %266 = vmatpush1.msra.mxu0 %v265
    %267 = vmatprep.subr.mxu0 0.0
    %v268 = vand.u32 %v29, 4294901760
    %v269 = vsub.f32 %v29, %v268
    %270 = vmatpush1.msra.mxu0 %v269
    %271 = vmatprep.subr.mxu0 0.0
    %272 = vmatpush1.msra.mxu0 0.0
    %273 = vmatprep.subr.mxu0 0.0
    %274 = vmatpush1.msra.mxu0 0.0
    %275 = vmatprep.subr.mxu0 0.0
    %276 = vmatpush1.msra.mxu0 0.0
    %277 = vmatprep.subr.mxu0 0.0
    %278 = vmatpush1.msra.mxu0 0.0
    %279 = vmatprep.subr.mxu0 0.0
    %280 = vmatpush1.msra.mxu0 0.0
    %281 = vmatprep.subr.mxu0 0.0
    %282 = vmatpush1.msra.mxu0 0.0
    %283 = vmatprep.subr.mxu0 0.0
    %284 = vmatpush1.msra.mxu0 0.0
    %285 = vmatprep.subr.mxu0 0.0
    %286 = vmatpush1.msra.mxu0 0.0
    %287 = vmatprep.subr.mxu0 0.0
    %288 = vmatpush1.msra.mxu0 0.0
    %289 = vmatprep.subr.mxu0 0.0
    %290 = vmatpush1.msra.mxu0 0.0
    %291 = vmatprep.subr.mxu0 0.0
    %292 = vmatpush1.msra.mxu0 0.0
    %293 = vmatprep.subr.mxu0 0.0
    %294 = vmatpush1.msra.mxu0 0.0
    %295 = vmatprep.subr.mxu0 0.0
    %296 = vmatpush1.msra.mxu0 0.0
    %297 = vmatprep.subr.mxu0 0.0
    %298 = vmatpush1.msra.mxu0 0.0
    %299 = vmatprep.subr.mxu0 0.0
    %300 = vmatpush1.msra.mxu0 0.0
    %301 = vmatprep.subr.mxu0 0.0
    %302 = vmatpush1.msra.mxu0 0.0
    %303 = vmatprep.subr.mxu0 0.0
    %304 = vmatpush1.msra.mxu0 0.0
    %305 = vmatprep.subr.mxu0 0.0
    %306 = vmatpush1.msra.mxu0 0.0
    %307 = vmatprep.subr.mxu0 0.0
    %308 = vmatpush1.msra.mxu0 0.0
    %309 = vmatprep.subr.mxu0 0.0
    %310 = vmatpush1.msra.mxu0 0.0
    %311 = vmatprep.subr.mxu0 0.0
    %312 = vmatpush1.msra.mxu0 0.0
    %313 = vmatprep.subr.mxu0 0.0
    %314 = vmatpush1.msra.mxu0 0.0
    %315 = vmatprep.subr.mxu0 0.0
    %316 = vmatpush1.msra.mxu0 0.0
    %317 = vmatprep.subr.mxu0 0.0
    %318 = vmatpush1.msra.mxu0 0.0
    %319 = vmatprep.mubr.f32.mxu0 0.0
    %v320 = vand.u32 %v43, 4294901760
    %v321 = vsub.f32 %v43, %v320
    %322 = vmatmul.mubr.f32.gmra.mrb[0].mxu0 %v321
    %v323 = vpop.f32.mrb[0].mxu0
    %v324 = vadd.f32 %v236, %v323
    %v325 = vpop.f32.mrb[0].mxu0
    %326 = vdwg.mxu0
    %327 = vmatprep.subr.mxu0 0.0
    %v328 = vand.u32 %v22, 4294901760
    %329 = vmatpush1.msra.mxu0 %v328
    %330 = vmatprep.subr.mxu0 0.0
    %v331 = vand.u32 %v23, 4294901760
    %332 = vmatpush1.msra.mxu0 %v331
    %333 = vmatprep.subr.mxu0 0.0
    %v334 = vand.u32 %v24, 4294901760
    %335 = vmatpush1.msra.mxu0 %v334
    %336 = vmatprep.subr.mxu0 0.0
    %v337 = vand.u32 %v25, 4294901760
    %338 = vmatpush1.msra.mxu0 %v337
    %339 = vmatprep.subr.mxu0 0.0
    %v340 = vand.u32 %v26, 4294901760
    %341 = vmatpush1.msra.mxu0 %v340
    %342 = vmatprep.subr.mxu0 0.0
    %v343 = vand.u32 %v27, 4294901760
    %344 = vmatpush1.msra.mxu0 %v343
    %345 = vmatprep.subr.mxu0 0.0
    %v346 = vand.u32 %v28, 4294901760
    %347 = vmatpush1.msra.mxu0 %v346
    %348 = vmatprep.subr.mxu0 0.0
    %v349 = vand.u32 %v29, 4294901760
    %350 = vmatpush1.msra.mxu0 %v349
    %351 = vmatprep.subr.mxu0 0.0
    %352 = vmatpush1.msra.mxu0 0.0
    %353 = vmatprep.subr.mxu0 0.0
    %354 = vmatpush1.msra.mxu0 0.0
    %355 = vmatprep.subr.mxu0 0.0
    %356 = vmatpush1.msra.mxu0 0.0
    %357 = vmatprep.subr.mxu0 0.0
    %358 = vmatpush1.msra.mxu0 0.0
    %359 = vmatprep.subr.mxu0 0.0
    %360 = vmatpush1.msra.mxu0 0.0
    %361 = vmatprep.subr.mxu0 0.0
    %362 = vmatpush1.msra.mxu0 0.0
    %363 = vmatprep.subr.mxu0 0.0
    %364 = vmatpush1.msra.mxu0 0.0
    %365 = vmatprep.subr.mxu0 0.0
    %366 = vmatpush1.msra.mxu0 0.0
    %367 = vmatprep.subr.mxu0 0.0
    %368 = vmatpush1.msra.mxu0 0.0
    %369 = vmatprep.subr.mxu0 0.0
    %370 = vmatpush1.msra.mxu0 0.0
    %371 = vmatprep.subr.mxu0 0.0
    %372 = vmatpush1.msra.mxu0 0.0
    %373 = vmatprep.subr.mxu0 0.0
    %374 = vmatpush1.msra.mxu0 0.0
    %375 = vmatprep.subr.mxu0 0.0
    %376 = vmatpush1.msra.mxu0 0.0
    %377 = vmatprep.subr.mxu0 0.0
    %378 = vmatpush1.msra.mxu0 0.0
    %379 = vmatprep.subr.mxu0 0.0
    %380 = vmatpush1.msra.mxu0 0.0
    %381 = vmatprep.subr.mxu0 0.0
    %382 = vmatpush1.msra.mxu0 0.0
    %383 = vmatprep.subr.mxu0 0.0
    %384 = vmatpush1.msra.mxu0 0.0
    %385 = vmatprep.subr.mxu0 0.0
    %386 = vmatpush1.msra.mxu0 0.0
    %387 = vmatprep.subr.mxu0 0.0
    %388 = vmatpush1.msra.mxu0 0.0
    %389 = vmatprep.subr.mxu0 0.0
    %390 = vmatpush1.msra.mxu0 0.0
    %391 = vmatprep.subr.mxu0 0.0
    %392 = vmatpush1.msra.mxu0 0.0
    %393 = vmatprep.subr.mxu0 0.0
    %394 = vmatpush1.msra.mxu0 0.0
    %395 = vmatprep.subr.mxu0 0.0
    %396 = vmatpush1.msra.mxu0 0.0
    %397 = vmatprep.subr.mxu0 0.0
    %398 = vmatpush1.msra.mxu0 0.0
    %399 = vmatprep.mubr.f32.mxu0 0.0
    %v400 = vand.u32 %v43, 4294901760
    %v401 = vsub.f32 %v43, %v400
    %v402 = vand.u32 %v401, 4294901760
    %403 = vmatmul.mubr.f32.gmra.mrb[0].mxu0 %v402
    %v404 = vpop.f32.mrb[0].mxu0
    %v405 = vadd.f32 %v324, %v404
    %v406 = vpop.f32.mrb[0].mxu0
    %407 = vdwg.mxu0
    %408 = vmatprep.subr.mxu0 0.0
    %v409 = vand.u32 %v22, 4294901760
    %v410 = vsub.f32 %v22, %v409
    %v411 = vand.u32 %v410, 4294901760
    %412 = vmatpush1.msra.mxu0 %v411
    %413 = vmatprep.subr.mxu0 0.0
    %v414 = vand.u32 %v23, 4294901760
    %v415 = vsub.f32 %v23, %v414
    %v416 = vand.u32 %v415, 4294901760
    %417 = vmatpush1.msra.mxu0 %v416
    %418 = vmatprep.subr.mxu0 0.0
    %v419 = vand.u32 %v24, 4294901760
    %v420 = vsub.f32 %v24, %v419
    %v421 = vand.u32 %v420, 4294901760
    %422 = vmatpush1.msra.mxu0 %v421
    %423 = vmatprep.subr.mxu0 0.0
    %v424 = vand.u32 %v25, 4294901760
    %v425 = vsub.f32 %v25, %v424
    %v426 = vand.u32 %v425, 4294901760
    %427 = vmatpush1.msra.mxu0 %v426
    %428 = vmatprep.subr.mxu0 0.0
    %v429 = vand.u32 %v26, 4294901760
    %v430 = vsub.f32 %v26, %v429
    %v431 = vand.u32 %v430, 4294901760
    %432 = vmatpush1.msra.mxu0 %v431
    %433 = vmatprep.subr.mxu0 0.0
    %v434 = vand.u32 %v27, 4294901760
    %v435 = vsub.f32 %v27, %v434
    %v436 = vand.u32 %v435, 4294901760
    %437 = vmatpush1.msra.mxu0 %v436
    %438 = vmatprep.subr.mxu0 0.0
    %v439 = vand.u32 %v28, 4294901760
    %v440 = vsub.f32 %v28, %v439
    %v441 = vand.u32 %v440, 4294901760
    %442 = vmatpush1.msra.mxu0 %v441
    %443 = vmatprep.subr.mxu0 0.0
    %v444 = vand.u32 %v29, 4294901760
    %v445 = vsub.f32 %v29, %v444
    %v446 = vand.u32 %v445, 4294901760
    %447 = vmatpush1.msra.mxu0 %v446
    %448 = vmatprep.subr.mxu0 0.0
    %449 = vmatpush1.msra.mxu0 0.0
    %450 = vmatprep.subr.mxu0 0.0
    %451 = vmatpush1.msra.mxu0 0.0
    %452 = vmatprep.subr.mxu0 0.0
    %453 = vmatpush1.msra.mxu0 0.0
    %454 = vmatprep.subr.mxu0 0.0
    %455 = vmatpush1.msra.mxu0 0.0
    %456 = vmatprep.subr.mxu0 0.0
    %457 = vmatpush1.msra.mxu0 0.0
    %458 = vmatprep.subr.mxu0 0.0
    %459 = vmatpush1.msra.mxu0 0.0
    %460 = vmatprep.subr.mxu0 0.0
    %461 = vmatpush1.msra.mxu0 0.0
    %462 = vmatprep.subr.mxu0 0.0
    %463 = vmatpush1.msra.mxu0 0.0
    %464 = vmatprep.subr.mxu0 0.0
    %465 = vmatpush1.msra.mxu0 0.0
    %466 = vmatprep.subr.mxu0 0.0
    %467 = vmatpush1.msra.mxu0 0.0
    %468 = vmatprep.subr.mxu0 0.0
    %469 = vmatpush1.msra.mxu0 0.0
    %470 = vmatprep.subr.mxu0 0.0
    %471 = vmatpush1.msra.mxu0 0.0
    %472 = vmatprep.subr.mxu0 0.0
    %473 = vmatpush1.msra.mxu0 0.0
    %474 = vmatprep.subr.mxu0 0.0
    %475 = vmatpush1.msra.mxu0 0.0
    %476 = vmatprep.subr.mxu0 0.0
    %477 = vmatpush1.msra.mxu0 0.0
    %478 = vmatprep.subr.mxu0 0.0
    %479 = vmatpush1.msra.mxu0 0.0
    %480 = vmatprep.subr.mxu0 0.0
    %481 = vmatpush1.msra.mxu0 0.0
    %482 = vmatprep.subr.mxu0 0.0
    %483 = vmatpush1.msra.mxu0 0.0
    %484 = vmatprep.subr.mxu0 0.0
    %485 = vmatpush1.msra.mxu0 0.0
    %486 = vmatprep.subr.mxu0 0.0
    %487 = vmatpush1.msra.mxu0 0.0
    %488 = vmatprep.subr.mxu0 0.0
    %489 = vmatpush1.msra.mxu0 0.0
    %490 = vmatprep.subr.mxu0 0.0
    %491 = vmatpush1.msra.mxu0 0.0
    %492 = vmatprep.subr.mxu0 0.0
    %493 = vmatpush1.msra.mxu0 0.0
    %494 = vmatprep.subr.mxu0 0.0
    %495 = vmatpush1.msra.mxu0 0.0
    %496 = vmatprep.mubr.f32.mxu0 0.0
    %v497 = vand.u32 %v43, 4294901760
    %498 = vmatmul.mubr.f32.gmra.mrb[0].mxu0 %v497
    %v499 = vpop.f32.mrb[0].mxu0
    %v500 = vadd.f32 %v405, %v499
    %v501 = vpop.f32.mrb[0].mxu0
    %502 = vdwg.mxu0
    %503 = vmatprep.subr.mxu0 0.0
    %v504 = vand.u32 %v22, 4294901760
    %505 = vmatpush1.msra.mxu0 %v504
    %506 = vmatprep.subr.mxu0 0.0
    %v507 = vand.u32 %v23, 4294901760
    %508 = vmatpush1.msra.mxu0 %v507
    %509 = vmatprep.subr.mxu0 0.0
    %v510 = vand.u32 %v24, 4294901760
    %511 = vmatpush1.msra.mxu0 %v510
    %512 = vmatprep.subr.mxu0 0.0
    %v513 = vand.u32 %v25, 4294901760
    %514 = vmatpush1.msra.mxu0 %v513
    %515 = vmatprep.subr.mxu0 0.0
    %v516 = vand.u32 %v26, 4294901760
    %517 = vmatpush1.msra.mxu0 %v516
    %518 = vmatprep.subr.mxu0 0.0
    %v519 = vand.u32 %v27, 4294901760
    %520 = vmatpush1.msra.mxu0 %v519
    %521 = vmatprep.subr.mxu0 0.0
    %v522 = vand.u32 %v28, 4294901760
    %523 = vmatpush1.msra.mxu0 %v522
    %524 = vmatprep.subr.mxu0 0.0
    %v525 = vand.u32 %v29, 4294901760
    %526 = vmatpush1.msra.mxu0 %v525
    %527 = vmatprep.subr.mxu0 0.0
    %528 = vmatpush1.msra.mxu0 0.0
    %529 = vmatprep.subr.mxu0 0.0
    %530 = vmatpush1.msra.mxu0 0.0
    %531 = vmatprep.subr.mxu0 0.0
    %532 = vmatpush1.msra.mxu0 0.0
    %533 = vmatprep.subr.mxu0 0.0
    %534 = vmatpush1.msra.mxu0 0.0
    %535 = vmatprep.subr.mxu0 0.0
    %536 = vmatpush1.msra.mxu0 0.0
    %537 = vmatprep.subr.mxu0 0.0
    %538 = vmatpush1.msra.mxu0 0.0
    %539 = vmatprep.subr.mxu0 0.0
    %540 = vmatpush1.msra.mxu0 0.0
    %541 = vmatprep.subr.mxu0 0.0
    %542 = vmatpush1.msra.mxu0 0.0
    %543 = vmatprep.subr.mxu0 0.0
    %544 = vmatpush1.msra.mxu0 0.0
    %545 = vmatprep.subr.mxu0 0.0
    %546 = vmatpush1.msra.mxu0 0.0
    %547 = vmatprep.subr.mxu0 0.0
    %548 = vmatpush1.msra.mxu0 0.0
    %549 = vmatprep.subr.mxu0 0.0
    %550 = vmatpush1.msra.mxu0 0.0
    %551 = vmatprep.subr.mxu0 0.0
    %552 = vmatpush1.msra.mxu0 0.0
    %553 = vmatprep.subr.mxu0 0.0
    %554 = vmatpush1.msra.mxu0 0.0
    %555 = vmatprep.subr.mxu0 0.0
    %556 = vmatpush1.msra.mxu0 0.0
    %557 = vmatprep.subr.mxu0 0.0
    %558 = vmatpush1.msra.mxu0 0.0
    %559 = vmatprep.subr.mxu0 0.0
    %560 = vmatpush1.msra.mxu0 0.0
    %561 = vmatprep.subr.mxu0 0.0
    %562 = vmatpush1.msra.mxu0 0.0
    %563 = vmatprep.subr.mxu0 0.0
    %564 = vmatpush1.msra.mxu0 0.0
    %565 = vmatprep.subr.mxu0 0.0
    %566 = vmatpush1.msra.mxu0 0.0
    %567 = vmatprep.subr.mxu0 0.0
    %568 = vmatpush1.msra.mxu0 0.0
    %569 = vmatprep.subr.mxu0 0.0
    %570 = vmatpush1.msra.mxu0 0.0
    %571 = vmatprep.subr.mxu0 0.0
    %572 = vmatpush1.msra.mxu0 0.0
    %573 = vmatprep.subr.mxu0 0.0
    %574 = vmatpush1.msra.mxu0 0.0
    %575 = vmatprep.mubr.f32.mxu0 0.0
    %v576 = vand.u32 %v43, 4294901760
    %577 = vmatmul.mubr.f32.gmra.mrb[0].mxu0 %v576
    %v578 = vpop.f32.mrb[0].mxu0
    %v579 = vadd.f32 %v500, %v578
    %v580 = vpop.f32.mrb[0].mxu0
    %581 = vdwg.mxu0
    %v582 = vtanh.pop %v579
    %v583 = vld [vmem:[%s4] sm:$0x1]
    %v585 = vlaneseq
    %v586 = vshrl.u32 %v585, 7
    %v587 = vsub.s32 0, %v586
    %v588 = vrot.slane %v583, %v587
    %vm590 = vcmask 261120
    %v592 = vsel %vm590, %v582, 0
    %594 = vmatprep.subr.mxu0 0.0
    %v595 = vand.u32 %v30, 4294901760
    %596 = vmatpush1.msra.mxu0 %v595
    %597 = vmatprep.subr.mxu0 0.0
    %v598 = vand.u32 %v31, 4294901760
    %599 = vmatpush1.msra.mxu0 %v598
    %600 = vmatprep.subr.mxu0 0.0
    %v601 = vand.u32 %v32, 4294901760
    %602 = vmatpush1.msra.mxu0 %v601
    %603 = vmatprep.subr.mxu0 0.0
    %v604 = vand.u32 %v33, 4294901760
    %605 = vmatpush1.msra.mxu0 %v604
    %606 = vmatprep.subr.mxu0 0.0
    %607 = vmatpush1.msra.mxu0 0.0
    %608 = vmatprep.subr.mxu0 0.0
    %609 = vmatpush1.msra.mxu0 0.0
    %610 = vmatprep.subr.mxu0 0.0
    %611 = vmatpush1.msra.mxu0 0.0
    %612 = vmatprep.subr.mxu0 0.0
    %613 = vmatpush1.msra.mxu0 0.0
    %614 = vmatprep.subr.mxu0 0.0
    %615 = vmatpush1.msra.mxu0 0.0
    %616 = vmatprep.subr.mxu0 0.0
    %617 = vmatpush1.msra.mxu0 0.0
    %618 = vmatprep.subr.mxu0 0.0
    %619 = vmatpush1.msra.mxu0 0.0
    %620 = vmatprep.subr.mxu0 0.0
    %621 = vmatpush1.msra.mxu0 0.0
    %622 = vmatprep.subr.mxu0 0.0
    %623 = vmatpush1.msra.mxu0 0.0
    %624 = vmatprep.subr.mxu0 0.0
    %625 = vmatpush1.msra.mxu0 0.0
    %626 = vmatprep.subr.mxu0 0.0
    %627 = vmatpush1.msra.mxu0 0.0
    %628 = vmatprep.subr.mxu0 0.0
    %629 = vmatpush1.msra.mxu0 0.0
    %630 = vmatprep.subr.mxu0 0.0
    %631 = vmatpush1.msra.mxu0 0.0
    %632 = vmatprep.subr.mxu0 0.0
    %633 = vmatpush1.msra.mxu0 0.0
    %634 = vmatprep.subr.mxu0 0.0
    %635 = vmatpush1.msra.mxu0 0.0
    %636 = vmatprep.subr.mxu0 0.0
    %637 = vmatpush1.msra.mxu0 0.0
    %638 = vmatprep.subr.mxu0 0.0
    %639 = vmatpush1.msra.mxu0 0.0
    %640 = vmatprep.subr.mxu0 0.0
    %641 = vmatpush1.msra.mxu0 0.0
    %642 = vmatprep.subr.mxu0 0.0
    %643 = vmatpush1.msra.mxu0 0.0
    %644 = vmatprep.subr.mxu0 0.0
    %645 = vmatpush1.msra.mxu0 0.0
    %646 = vmatprep.subr.mxu0 0.0
    %647 = vmatpush1.msra.mxu0 0.0
    %648 = vmatprep.subr.mxu0 0.0
    %649 = vmatpush1.msra.mxu0 0.0
    %650 = vmatprep.subr.mxu0 0.0
    %651 = vmatpush1.msra.mxu0 0.0
    %652 = vmatprep.subr.mxu0 0.0
    %653 = vmatpush1.msra.mxu0 0.0
    %654 = vmatprep.subr.mxu0 0.0
    %655 = vmatpush1.msra.mxu0 0.0
    %656 = vmatprep.subr.mxu0 0.0
    %657 = vmatpush1.msra.mxu0 0.0
    %658 = vmatprep.subr.mxu0 0.0
    %659 = vmatpush1.msra.mxu0 0.0
    %660 = vmatprep.subr.mxu0 0.0
    %661 = vmatpush1.msra.mxu0 0.0
    %662 = vmatprep.mubr.f32.mxu0 0.0
    %v663 = vand.u32 %v592, 4294901760
    %v664 = vsub.f32 %v592, %v663
    %v665 = vand.u32 %v664, 4294901760
    %v666 = vsub.f32 %v664, %v665
    %v667 = vand.u32 %v666, 4294901760
    %668 = vmatmul.mubr.f32.gmra.mrb[0].mxu0 %v667
    %v669 = vpop.f32.mrb[0].mxu0
    %v670 = vadd.f32 %v588, %v669
    %v671 = vpop.f32.mrb[0].mxu0
    %672 = vdwg.mxu0
    %673 = vmatprep.subr.mxu0 0.0
    %v674 = vand.u32 %v30, 4294901760
    %v675 = vsub.f32 %v30, %v674
    %v676 = vand.u32 %v675, 4294901760
    %v677 = vsub.f32 %v675, %v676
    %v678 = vand.u32 %v677, 4294901760
    %679 = vmatpush1.msra.mxu0 %v678
    %680 = vmatprep.subr.mxu0 0.0
    %v681 = vand.u32 %v31, 4294901760
    %v682 = vsub.f32 %v31, %v681
    %v683 = vand.u32 %v682, 4294901760
    %v684 = vsub.f32 %v682, %v683
    %v685 = vand.u32 %v684, 4294901760
    %686 = vmatpush1.msra.mxu0 %v685
    %687 = vmatprep.subr.mxu0 0.0
    %v688 = vand.u32 %v32, 4294901760
    %v689 = vsub.f32 %v32, %v688
    %v690 = vand.u32 %v689, 4294901760
    %v691 = vsub.f32 %v689, %v690
    %v692 = vand.u32 %v691, 4294901760
    %693 = vmatpush1.msra.mxu0 %v692
    %694 = vmatprep.subr.mxu0 0.0
    %v695 = vand.u32 %v33, 4294901760
    %v696 = vsub.f32 %v33, %v695
    %v697 = vand.u32 %v696, 4294901760
    %v698 = vsub.f32 %v696, %v697
    %v699 = vand.u32 %v698, 4294901760
    %700 = vmatpush1.msra.mxu0 %v699
    %701 = vmatprep.subr.mxu0 0.0
    %702 = vmatpush1.msra.mxu0 0.0
    %703 = vmatprep.subr.mxu0 0.0
    %704 = vmatpush1.msra.mxu0 0.0
    %705 = vmatprep.subr.mxu0 0.0
    %706 = vmatpush1.msra.mxu0 0.0
    %707 = vmatprep.subr.mxu0 0.0
    %708 = vmatpush1.msra.mxu0 0.0
    %709 = vmatprep.subr.mxu0 0.0
    %710 = vmatpush1.msra.mxu0 0.0
    %711 = vmatprep.subr.mxu0 0.0
    %712 = vmatpush1.msra.mxu0 0.0
    %713 = vmatprep.subr.mxu0 0.0
    %714 = vmatpush1.msra.mxu0 0.0
    %715 = vmatprep.subr.mxu0 0.0
    %716 = vmatpush1.msra.mxu0 0.0
    %717 = vmatprep.subr.mxu0 0.0
    %718 = vmatpush1.msra.mxu0 0.0
    %719 = vmatprep.subr.mxu0 0.0
    %720 = vmatpush1.msra.mxu0 0.0
    %721 = vmatprep.subr.mxu0 0.0
    %722 = vmatpush1.msra.mxu0 0.0
    %723 = vmatprep.subr.mxu0 0.0
    %724 = vmatpush1.msra.mxu0 0.0
    %725 = vmatprep.subr.mxu0 0.0
    %726 = vmatpush1.msra.mxu0 0.0
    %727 = vmatprep.subr.mxu0 0.0
    %728 = vmatpush1.msra.mxu0 0.0
    %729 = vmatprep.subr.mxu0 0.0
    %730 = vmatpush1.msra.mxu0 0.0
    %731 = vmatprep.subr.mxu0 0.0
    %732 = vmatpush1.msra.mxu0 0.0
    %733 = vmatprep.subr.mxu0 0.0
    %734 = vmatpush1.msra.mxu0 0.0
    %735 = vmatprep.subr.mxu0 0.0
    %736 = vmatpush1.msra.mxu0 0.0
    %737 = vmatprep.subr.mxu0 0.0
    %738 = vmatpush1.msra.mxu0 0.0
    %739 = vmatprep.subr.mxu0 0.0
    %740 = vmatpush1.msra.mxu0 0.0
    %741 = vmatprep.subr.mxu0 0.0
    %742 = vmatpush1.msra.mxu0 0.0
    %743 = vmatprep.subr.mxu0 0.0
    %744 = vmatpush1.msra.mxu0 0.0
    %745 = vmatprep.subr.mxu0 0.0
    %746 = vmatpush1.msra.mxu0 0.0
    %747 = vmatprep.subr.mxu0 0.0
    %748 = vmatpush1.msra.mxu0 0.0
    %749 = vmatprep.subr.mxu0 0.0
    %750 = vmatpush1.msra.mxu0 0.0
    %751 = vmatprep.subr.mxu0 0.0
    %752 = vmatpush1.msra.mxu0 0.0
    %753 = vmatprep.subr.mxu0 0.0
    %754 = vmatpush1.msra.mxu0 0.0
    %755 = vmatprep.subr.mxu0 0.0
    %756 = vmatpush1.msra.mxu0 0.0
    %757 = vmatprep.mubr.f32.mxu0 0.0
    %v758 = vand.u32 %v592, 4294901760
    %759 = vmatmul.mubr.f32.gmra.mrb[0].mxu0 %v758
    %v760 = vpop.f32.mrb[0].mxu0
    %v761 = vadd.f32 %v670, %v760
    %v762 = vpop.f32.mrb[0].mxu0
    %763 = vdwg.mxu0
    %764 = vmatprep.subr.mxu0 0.0
    %v765 = vand.u32 %v30, 4294901760
    %v766 = vsub.f32 %v30, %v765
    %767 = vmatpush1.msra.mxu0 %v766
    %768 = vmatprep.subr.mxu0 0.0
    %v769 = vand.u32 %v31, 4294901760
    %v770 = vsub.f32 %v31, %v769
    %771 = vmatpush1.msra.mxu0 %v770
    %772 = vmatprep.subr.mxu0 0.0
    %v773 = vand.u32 %v32, 4294901760
    %v774 = vsub.f32 %v32, %v773
    %775 = vmatpush1.msra.mxu0 %v774
    %776 = vmatprep.subr.mxu0 0.0
    %v777 = vand.u32 %v33, 4294901760
    %v778 = vsub.f32 %v33, %v777
    %779 = vmatpush1.msra.mxu0 %v778
    %780 = vmatprep.subr.mxu0 0.0
    %781 = vmatpush1.msra.mxu0 0.0
    %782 = vmatprep.subr.mxu0 0.0
    %783 = vmatpush1.msra.mxu0 0.0
    %784 = vmatprep.subr.mxu0 0.0
    %785 = vmatpush1.msra.mxu0 0.0
    %786 = vmatprep.subr.mxu0 0.0
    %787 = vmatpush1.msra.mxu0 0.0
    %788 = vmatprep.subr.mxu0 0.0
    %789 = vmatpush1.msra.mxu0 0.0
    %790 = vmatprep.subr.mxu0 0.0
    %791 = vmatpush1.msra.mxu0 0.0
    %792 = vmatprep.subr.mxu0 0.0
    %793 = vmatpush1.msra.mxu0 0.0
    %794 = vmatprep.subr.mxu0 0.0
    %795 = vmatpush1.msra.mxu0 0.0
    %796 = vmatprep.subr.mxu0 0.0
    %797 = vmatpush1.msra.mxu0 0.0
    %798 = vmatprep.subr.mxu0 0.0
    %799 = vmatpush1.msra.mxu0 0.0
    %800 = vmatprep.subr.mxu0 0.0
    %801 = vmatpush1.msra.mxu0 0.0
    %802 = vmatprep.subr.mxu0 0.0
    %803 = vmatpush1.msra.mxu0 0.0
    %804 = vmatprep.subr.mxu0 0.0
    %805 = vmatpush1.msra.mxu0 0.0
    %806 = vmatprep.subr.mxu0 0.0
    %807 = vmatpush1.msra.mxu0 0.0
    %808 = vmatprep.subr.mxu0 0.0
    %809 = vmatpush1.msra.mxu0 0.0
    %810 = vmatprep.subr.mxu0 0.0
    %811 = vmatpush1.msra.mxu0 0.0
    %812 = vmatprep.subr.mxu0 0.0
    %813 = vmatpush1.msra.mxu0 0.0
    %814 = vmatprep.subr.mxu0 0.0
    %815 = vmatpush1.msra.mxu0 0.0
    %816 = vmatprep.subr.mxu0 0.0
    %817 = vmatpush1.msra.mxu0 0.0
    %818 = vmatprep.subr.mxu0 0.0
    %819 = vmatpush1.msra.mxu0 0.0
    %820 = vmatprep.subr.mxu0 0.0
    %821 = vmatpush1.msra.mxu0 0.0
    %822 = vmatprep.subr.mxu0 0.0
    %823 = vmatpush1.msra.mxu0 0.0
    %824 = vmatprep.subr.mxu0 0.0
    %825 = vmatpush1.msra.mxu0 0.0
    %826 = vmatprep.subr.mxu0 0.0
    %827 = vmatpush1.msra.mxu0 0.0
    %828 = vmatprep.subr.mxu0 0.0
    %829 = vmatpush1.msra.mxu0 0.0
    %830 = vmatprep.subr.mxu0 0.0
    %831 = vmatpush1.msra.mxu0 0.0
    %832 = vmatprep.subr.mxu0 0.0
    %833 = vmatpush1.msra.mxu0 0.0
    %834 = vmatprep.subr.mxu0 0.0
    %835 = vmatpush1.msra.mxu0 0.0
    %836 = vmatprep.mubr.f32.mxu0 0.0
    %v837 = vand.u32 %v592, 4294901760
    %v838 = vsub.f32 %v592, %v837
    %839 = vmatmul.mubr.f32.gmra.mrb[0].mxu0 %v838
    %v840 = vpop.f32.mrb[0].mxu0
    %v841 = vadd.f32 %v761, %v840
    %v842 = vpop.f32.mrb[0].mxu0
    %843 = vdwg.mxu0
    %844 = vmatprep.subr.mxu0 0.0
    %v845 = vand.u32 %v30, 4294901760
    %846 = vmatpush1.msra.mxu0 %v845
    %847 = vmatprep.subr.mxu0 0.0
    %v848 = vand.u32 %v31, 4294901760
    %849 = vmatpush1.msra.mxu0 %v848
    %850 = vmatprep.subr.mxu0 0.0
    %v851 = vand.u32 %v32, 4294901760
    %852 = vmatpush1.msra.mxu0 %v851
    %853 = vmatprep.subr.mxu0 0.0
    %v854 = vand.u32 %v33, 4294901760
    %855 = vmatpush1.msra.mxu0 %v854
    %856 = vmatprep.subr.mxu0 0.0
    %857 = vmatpush1.msra.mxu0 0.0
    %858 = vmatprep.subr.mxu0 0.0
    %859 = vmatpush1.msra.mxu0 0.0
    %860 = vmatprep.subr.mxu0 0.0
    %861 = vmatpush1.msra.mxu0 0.0
    %862 = vmatprep.subr.mxu0 0.0
    %863 = vmatpush1.msra.mxu0 0.0
    %864 = vmatprep.subr.mxu0 0.0
    %865 = vmatpush1.msra.mxu0 0.0
    %866 = vmatprep.subr.mxu0 0.0
    %867 = vmatpush1.msra.mxu0 0.0
    %868 = vmatprep.subr.mxu0 0.0
    %869 = vmatpush1.msra.mxu0 0.0
    %870 = vmatprep.subr.mxu0 0.0
    %871 = vmatpush1.msra.mxu0 0.0
    %872 = vmatprep.subr.mxu0 0.0
    %873 = vmatpush1.msra.mxu0 0.0
    %874 = vmatprep.subr.mxu0 0.0
    %875 = vmatpush1.msra.mxu0 0.0
    %876 = vmatprep.subr.mxu0 0.0
    %877 = vmatpush1.msra.mxu0 0.0
    %878 = vmatprep.subr.mxu0 0.0
    %879 = vmatpush1.msra.mxu0 0.0
    %880 = vmatprep.subr.mxu0 0.0
    %881 = vmatpush1.msra.mxu0 0.0
    %882 = vmatprep.subr.mxu0 0.0
    %883 = vmatpush1.msra.mxu0 0.0
    %884 = vmatprep.subr.mxu0 0.0
    %885 = vmatpush1.msra.mxu0 0.0
    %886 = vmatprep.subr.mxu0 0.0
    %887 = vmatpush1.msra.mxu0 0.0
    %888 = vmatprep.subr.mxu0 0.0
    %889 = vmatpush1.msra.mxu0 0.0
    %890 = vmatprep.subr.mxu0 0.0
    %891 = vmatpush1.msra.mxu0 0.0
    %892 = vmatprep.subr.mxu0 0.0
    %893 = vmatpush1.msra.mxu0 0.0
    %894 = vmatprep.subr.mxu0 0.0
    %895 = vmatpush1.msra.mxu0 0.0
    %896 = vmatprep.subr.mxu0 0.0
    %897 = vmatpush1.msra.mxu0 0.0
    %898 = vmatprep.subr.mxu0 0.0
    %899 = vmatpush1.msra.mxu0 0.0
    %900 = vmatprep.subr.mxu0 0.0
    %901 = vmatpush1.msra.mxu0 0.0
    %902 = vmatprep.subr.mxu0 0.0
    %903 = vmatpush1.msra.mxu0 0.0
    %904 = vmatprep.subr.mxu0 0.0
    %905 = vmatpush1.msra.mxu0 0.0
    %906 = vmatprep.subr.mxu0 0.0
    %907 = vmatpush1.msra.mxu0 0.0
    %908 = vmatprep.subr.mxu0 0.0
    %909 = vmatpush1.msra.mxu0 0.0
    %910 = vmatprep.subr.mxu0 0.0
    %911 = vmatpush1.msra.mxu0 0.0
    %912 = vmatprep.mubr.f32.mxu0 0.0
    %v913 = vand.u32 %v592, 4294901760
    %v914 = vsub.f32 %v592, %v913
    %v915 = vand.u32 %v914, 4294901760
    %916 = vmatmul.mubr.f32.gmra.mrb[0].mxu0 %v915
    %v917 = vpop.f32.mrb[0].mxu0
    %v918 = vadd.f32 %v841, %v917
    %v919 = vpop.f32.mrb[0].mxu0
    %920 = vdwg.mxu0
    %921 = vmatprep.subr.mxu0 0.0
    %v922 = vand.u32 %v30, 4294901760
    %v923 = vsub.f32 %v30, %v922
    %v924 = vand.u32 %v923, 4294901760
    %925 = vmatpush1.msra.mxu0 %v924
    %926 = vmatprep.subr.mxu0 0.0
    %v927 = vand.u32 %v31, 4294901760
    %v928 = vsub.f32 %v31, %v927
    %v929 = vand.u32 %v928, 4294901760
    %930 = vmatpush1.msra.mxu0 %v929
    %931 = vmatprep.subr.mxu0 0.0
    %v932 = vand.u32 %v32, 4294901760
    %v933 = vsub.f32 %v32, %v932
    %v934 = vand.u32 %v933, 4294901760
    %935 = vmatpush1.msra.mxu0 %v934
    %936 = vmatprep.subr.mxu0 0.0
    %v937 = vand.u32 %v33, 4294901760
    %v938 = vsub.f32 %v33, %v937
    %v939 = vand.u32 %v938, 4294901760
    %940 = vmatpush1.msra.mxu0 %v939
    %941 = vmatprep.subr.mxu0 0.0
    %942 = vmatpush1.msra.mxu0 0.0
    %943 = vmatprep.subr.mxu0 0.0
    %944 = vmatpush1.msra.mxu0 0.0
    %945 = vmatprep.subr.mxu0 0.0
    %946 = vmatpush1.msra.mxu0 0.0
    %947 = vmatprep.subr.mxu0 0.0
    %948 = vmatpush1.msra.mxu0 0.0
    %949 = vmatprep.subr.mxu0 0.0
    %950 = vmatpush1.msra.mxu0 0.0
    %951 = vmatprep.subr.mxu0 0.0
    %952 = vmatpush1.msra.mxu0 0.0
    %953 = vmatprep.subr.mxu0 0.0
    %954 = vmatpush1.msra.mxu0 0.0
    %955 = vmatprep.subr.mxu0 0.0
    %956 = vmatpush1.msra.mxu0 0.0
    %957 = vmatprep.subr.mxu0 0.0
    %958 = vmatpush1.msra.mxu0 0.0
    %959 = vmatprep.subr.mxu0 0.0
    %960 = vmatpush1.msra.mxu0 0.0
    %961 = vmatprep.subr.mxu0 0.0
    %962 = vmatpush1.msra.mxu0 0.0
    %963 = vmatprep.subr.mxu0 0.0
    %964 = vmatpush1.msra.mxu0 0.0
    %965 = vmatprep.subr.mxu0 0.0
    %966 = vmatpush1.msra.mxu0 0.0
    %967 = vmatprep.subr.mxu0 0.0
    %968 = vmatpush1.msra.mxu0 0.0
    %969 = vmatprep.subr.mxu0 0.0
    %970 = vmatpush1.msra.mxu0 0.0
    %971 = vmatprep.subr.mxu0 0.0
    %972 = vmatpush1.msra.mxu0 0.0
    %973 = vmatprep.subr.mxu0 0.0
    %974 = vmatpush1.msra.mxu0 0.0
    %975 = vmatprep.subr.mxu0 0.0
    %976 = vmatpush1.msra.mxu0 0.0
    %977 = vmatprep.subr.mxu0 0.0
    %978 = vmatpush1.msra.mxu0 0.0
    %979 = vmatprep.subr.mxu0 0.0
    %980 = vmatpush1.msra.mxu0 0.0
    %981 = vmatprep.subr.mxu0 0.0
    %982 = vmatpush1.msra.mxu0 0.0
    %983 = vmatprep.subr.mxu0 0.0
    %984 = vmatpush1.msra.mxu0 0.0
    %985 = vmatprep.subr.mxu0 0.0
    %986 = vmatpush1.msra.mxu0 0.0
    %987 = vmatprep.subr.mxu0 0.0
    %988 = vmatpush1.msra.mxu0 0.0
    %989 = vmatprep.subr.mxu0 0.0
    %990 = vmatpush1.msra.mxu0 0.0
    %991 = vmatprep.subr.mxu0 0.0
    %992 = vmatpush1.msra.mxu0 0.0
    %993 = vmatprep.subr.mxu0 0.0
    %994 = vmatpush1.msra.mxu0 0.0
    %995 = vmatprep.subr.mxu0 0.0
    %996 = vmatpush1.msra.mxu0 0.0
    %997 = vmatprep.mubr.f32.mxu0 0.0
    %v998 = vand.u32 %v592, 4294901760
    %999 = vmatmul.mubr.f32.gmra.mrb[0].mxu0 %v998
    %v1000 = vpop.f32.mrb[0].mxu0
    %v1001 = vadd.f32 %v918, %v1000
    %v1002 = vpop.f32.mrb[0].mxu0
    %1003 = vdwg.mxu0
    %1004 = vmatprep.subr.mxu0 0.0
    %v1005 = vand.u32 %v30, 4294901760
    %1006 = vmatpush1.msra.mxu0 %v1005
    %1007 = vmatprep.subr.mxu0 0.0
    %v1008 = vand.u32 %v31, 4294901760
    %1009 = vmatpush1.msra.mxu0 %v1008
    %1010 = vmatprep.subr.mxu0 0.0
    %v1011 = vand.u32 %v32, 4294901760
    %1012 = vmatpush1.msra.mxu0 %v1011
    %1013 = vmatprep.subr.mxu0 0.0
    %v1014 = vand.u32 %v33, 4294901760
    %1015 = vmatpush1.msra.mxu0 %v1014
    %1016 = vmatprep.subr.mxu0 0.0
    %1017 = vmatpush1.msra.mxu0 0.0
    %1018 = vmatprep.subr.mxu0 0.0
    %1019 = vmatpush1.msra.mxu0 0.0
    %1020 = vmatprep.subr.mxu0 0.0
    %1021 = vmatpush1.msra.mxu0 0.0
    %1022 = vmatprep.subr.mxu0 0.0
    %1023 = vmatpush1.msra.mxu0 0.0
    %1024 = vmatprep.subr.mxu0 0.0
    %1025 = vmatpush1.msra.mxu0 0.0
    %1026 = vmatprep.subr.mxu0 0.0
    %1027 = vmatpush1.msra.mxu0 0.0
    %1028 = vmatprep.subr.mxu0 0.0
    %1029 = vmatpush1.msra.mxu0 0.0
    %1030 = vmatprep.subr.mxu0 0.0
    %1031 = vmatpush1.msra.mxu0 0.0
    %1032 = vmatprep.subr.mxu0 0.0
    %1033 = vmatpush1.msra.mxu0 0.0
    %1034 = vmatprep.subr.mxu0 0.0
    %1035 = vmatpush1.msra.mxu0 0.0
    %1036 = vmatprep.subr.mxu0 0.0
    %1037 = vmatpush1.msra.mxu0 0.0
    %1038 = vmatprep.subr.mxu0 0.0
    %1039 = vmatpush1.msra.mxu0 0.0
    %1040 = vmatprep.subr.mxu0 0.0
    %1041 = vmatpush1.msra.mxu0 0.0
    %1042 = vmatprep.subr.mxu0 0.0
    %1043 = vmatpush1.msra.mxu0 0.0
    %1044 = vmatprep.subr.mxu0 0.0
    %1045 = vmatpush1.msra.mxu0 0.0
    %1046 = vmatprep.subr.mxu0 0.0
    %1047 = vmatpush1.msra.mxu0 0.0
    %1048 = vmatprep.subr.mxu0 0.0
    %1049 = vmatpush1.msra.mxu0 0.0
    %1050 = vmatprep.subr.mxu0 0.0
    %1051 = vmatpush1.msra.mxu0 0.0
    %1052 = vmatprep.subr.mxu0 0.0
    %1053 = vmatpush1.msra.mxu0 0.0
    %1054 = vmatprep.subr.mxu0 0.0
    %1055 = vmatpush1.msra.mxu0 0.0
    %1056 = vmatprep.subr.mxu0 0.0
    %1057 = vmatpush1.msra.mxu0 0.0
    %1058 = vmatprep.subr.mxu0 0.0
    %1059 = vmatpush1.msra.mxu0 0.0
    %1060 = vmatprep.subr.mxu0 0.0
    %1061 = vmatpush1.msra.mxu0 0.0
    %1062 = vmatprep.subr.mxu0 0.0
    %1063 = vmatpush1.msra.mxu0 0.0
    %1064 = vmatprep.subr.mxu0 0.0
    %1065 = vmatpush1.msra.mxu0 0.0
    %1066 = vmatprep.subr.mxu0 0.0
    %1067 = vmatpush1.msra.mxu0 0.0
    %1068 = vmatprep.subr.mxu0 0.0
    %1069 = vmatpush1.msra.mxu0 0.0
    %1070 = vmatprep.subr.mxu0 0.0
    %1071 = vmatpush1.msra.mxu0 0.0
    %1072 = vmatprep.mubr.f32.mxu0 0.0
    %v1073 = vand.u32 %v592, 4294901760
    %1074 = vmatmul.mubr.f32.gmra.mrb[0].mxu0 %v1073
    %v1075 = vpop.f32.mrb[0].mxu0
    %v1076 = vadd.f32 %v1001, %v1075
    %v1077 = vpop.f32.mrb[0].mxu0
    %1078 = vdwg.mxu0
    %v1079 = vtanh.pop %v1076
    %vm1080 = vcmask 130048
    %1081 = vst.msk [vmem:[#allocation2] sm:$0xff] %vm1080, %v1079
    // Predicated region
    $region22: #{tpu_custom_call.1} parent=1 // pred_check
      _
    $region23: #{tpu_custom_call.1} parent=1 // pred_check_branch
      %1083 = sbr.rel (0) target = $region25
    $region24: #{tpu_custom_call.1} parent=1 // pred_region
      %s1085 = ssub.s32 128, 128
      %1086 = vsyncadd [#allocation3], %s1085
      %s1088 = sshll.u32 [#allocation2], 4
      %s1089 = int_to_ptr.vmem [resolvable:$true] %s1088
      %1091 = dma.vmem_to_hbm [thread:$0]  %s1089, 128, %s5, [#allocation3]
    $region25: #{tpu_custom_call.1} parent=1 // pred_fallthru
      _
    // Predicated region
    $region26: #{tpu_custom_call.1} parent=1 // pred_check
      _
    $region27: #{tpu_custom_call.1} parent=1 // pred_check_branch
      %1093 = sbr.rel (0) target = $region29
    $region28: #{tpu_custom_call.1} parent=1 // pred_region
      %1094 = dma.done [#allocation3], 128
    $region29: #{tpu_custom_call.1} parent=1 // pred_fallthru
      _
    %1095 = vsyncpa [#allocation3], 1

</llo_original>
